<compile_context>
chip_gen: v6e
topology: v6e:2x2x1
jax: 0.10.0
libtpu: 0.0.40
codegen_flags: <defaults>
</compile_context>

<pallas_src>
import functools

import jax
import jax.numpy as jnp
from jax import lax
from jax.experimental import pallas as pl
from jax.experimental.pallas import tpu as pltpu


LEAKY_SLOPE = 0.01   # F.leaky_relu default negative_slope
BN_EPS = 1e-5        # nn.BatchNorm2d default eps
DROP_P = 0.5         # F.dropout default p (training=True)


def _conv_block_kernel(x_ref, w1_ref, b1_ref, w2_ref, b2_ref, g_ref, beta_ref,
                       mask_ref, drop_ref, o_ref, *, img_w):
    """Fused ConvBlock forward.

    x_ref:        (Cin_p, X)      f32, X = N*H*W (flattened positions on lanes)
    w1_ref:       (Cout, 9*Cin_p) bf16, im2col-flattened, row order (ky, kx, ci)
    w2_ref:       (Cout, 9*Cout)  bf16
    b1/b2/g/beta: (Cout, 1)       f32
    mask_ref:     (9, X)          f32, 1.0 where the (ky, kx) tap is inside the image
    drop_ref:     (Cout, X)       f32, dropout scale (0.0 or 1/(1-p))
    o_ref:        (Cout, X)       f32, lane-dense output
    """
    _, x_len = x_ref.shape
    halo = img_w + 1   # enough zero slack for any 3x3 tap offset (|dy*W + dx| <= W+1)

    def conv3x3(act, wmat):
        # act: (C, X) f32;  wmat: (Cout, 9*C) bf16.
        c = act.shape[0]
        zpad = jnp.zeros((c, halo), jnp.float32)
        apad = jnp.concatenate([zpad, act, zpad], axis=1)           # (C, X + 2*halo)
        taps = []
        t = 0
        for dy in (-1, 0, 1):
            for dx in (-1, 0, 1):
                off = dy * img_w + dx
                shifted = apad[:, halo + off: halo + off + x_len]   # (C, X)
                taps.append(shifted * mask_ref[t:t + 1, :])         # zero outside image
                t += 1
        # im2col slab stacked along sublanes -> a single MXU matmul per conv.
        slab = jnp.concatenate(taps, axis=0).astype(jnp.bfloat16)   # (9*C, X)
        return jnp.dot(wmat, slab, preferred_element_type=jnp.float32)  # (Cout, X) f32

    def bn_leaky_relu(y):
        # BatchNorm2d training mode: biased batch stats over all N*H*W positions,
        # computed in ONE pass (sum + sum-of-squares), followed by leaky_relu.
        inv_n = 1.0 / x_len
        s = jnp.sum(y, axis=1, keepdims=True)
        ss = jnp.sum(y * y, axis=1, keepdims=True)
        mean = s * inv_n
        var = jnp.maximum(ss * inv_n - mean * mean, 0.0)
        scale = lax.rsqrt(var + BN_EPS) * g_ref[...]
        yhat = (y - mean) * scale + beta_ref[...]
        return jnp.where(yhat >= 0.0, yhat, LEAKY_SLOPE * yhat)

    x = x_ref[...]                                                  # (Cin_p, X) f32
    h1 = bn_leaky_relu(conv3x3(x, w1_ref[...]) + b1_ref[...])
    h2 = bn_leaky_relu(conv3x3(h1, w2_ref[...]) + b2_ref[...])
    # Dropout (p=0.5, training): keep/scale mask precomputed lane-dense in the wrapper.
    o_ref[...] = h2 * drop_ref[...]


# TODO(synk): for inputs too large for VMEM, add a grid over rows with a two-phase
# BatchNorm (sum/sumsq reduction pass, then normalize pass) and mark the row axis
# "parallel" so v7x shards it across both TensorCores.  At the shapes this block
# is used with the whole problem is ~100 KiB, so a single invocation is already
# bound by the input/output HBM copies.
@jax.jit
def conv_block_forward(x_nchw, w1_oihw, b1, w2_oihw, b2, gamma, beta, dropout_key):
    """ConvBlock forward. x_nchw: (N, Cin, H, W) f32 -> (N, Cout, H, W) f32."""
    n, cin, h, w = x_nchw.shape
    cout = w1_oihw.shape[0]
    x_len = n * h * w
    cin_p = ((cin + 7) // 8) * 8       # pad input channels up to the 8-sublane tile

    # Channels-first, positions flattened: (Cin_p, N*H*W).  No spatial HBM pad —
    # the conv halo is handled with boundary masks inside the kernel.
    x2d = jnp.transpose(x_nchw, (1, 0, 2, 3)).reshape(cin, x_len).astype(jnp.float32)
    if cin_p != cin:
        x2d = jnp.pad(x2d, ((0, cin_p - cin), (0, 0)))

    # PyTorch OIHW -> im2col-flattened (Cout, 9*Cin_p), row order (ky, kx, ci),
    # cast to bf16 for the MXU (accumulation stays f32).
    w1_t = jnp.transpose(w1_oihw, (0, 2, 3, 1))                     # (Cout, 3, 3, Cin)
    if cin_p != cin:
        w1_t = jnp.pad(w1_t, ((0, 0), (0, 0), (0, 0), (0, cin_p - cin)))
    w1m = w1_t.reshape(cout, 9 * cin_p).astype(jnp.bfloat16)
    w2m = jnp.transpose(w2_oihw, (0, 2, 3, 1)).reshape(cout, 9 * cout).astype(jnp.bfloat16)

    b1c = b1.reshape(cout, 1).astype(jnp.float32)
    b2c = b2.reshape(cout, 1).astype(jnp.float32)
    gc = gamma.reshape(cout, 1).astype(jnp.float32)
    betac = beta.reshape(cout, 1).astype(jnp.float32)

    # Per-tap validity masks for the 3x3 halo (static, tiny: 9 x N*H*W f32).
    pos = jnp.arange(x_len, dtype=jnp.int32)
    wcol = pos % w
    hrow = (pos // w) % h
    tap_masks = []
    for dy in (-1, 0, 1):
        for dx in (-1, 0, 1):
            valid = ((wcol + dx >= 0) & (wcol + dx < w) &
                     (hrow + dy >= 0) & (hrow + dy < h))
            tap_masks.append(valid)
    masks = jnp.stack(tap_masks, axis=0).astype(jnp.float32)        # (9, X)

    # Dropout mask generated directly in the kernel's lane-dense layout.
    # TODO(synk): uses jax.random (not bit-identical to torch's RNG stream); the
    # TPU hardware PRNG (pltpu.prng_*) is avoided because it has no
    # interpret/CPU lowering, which is what broke the previous version.
    keep = jax.random.bernoulli(dropout_key, 1.0 - DROP_P, (cout, x_len))
    drop = keep.astype(jnp.float32) * (1.0 / (1.0 - DROP_P))

    kernel = functools.partial(_conv_block_kernel, img_w=w)

    flops = (2 * x_len * 9 * cin_p * cout        # conv1 matmul
             + 2 * x_len * 9 * cout * cout       # conv2 matmul
             + 30 * x_len * cout)                # BN / leaky_relu / dropout epilogue
    bytes_accessed = (4 * (cin_p + 9 + 2 * cout) * x_len
                      + 2 * 9 * cout * (cin_p + cout))

    vmem = pl.BlockSpec(memory_space=pltpu.MemorySpace.VMEM)
    out = pl.pallas_call(
        kernel,
        out_shape=jax.ShapeDtypeStruct((cout, x_len), jnp.float32),
        in_specs=[vmem] * 9,
        out_specs=vmem,
        compiler_params=pltpu.CompilerParams(vmem_limit_bytes=32 * 1024 * 1024),
        cost_estimate=pl.CostEstimate(flops=flops, transcendentals=2 * cout,
                                      bytes_accessed=bytes_accessed),
    )(x2d, w1m, b1c, w2m, b2c, gc, betac, masks, drop)

    # (Cout, N*H*W) -> (N, Cout, H, W)
    return out.reshape(cout, n, h, w).transpose(1, 0, 2, 3)


# TODO(synk): nn.BatchNorm2d's running_mean/running_var buffer updates (training
# bookkeeping) are not materialized; they do not affect the forward output.
def init_params(key, inchannels, outchannels):
    """Deterministic synthetic parameters (PyTorch-style shapes: OIHW conv weights)."""
    k1, k2, k3, k4, k5, k6 = jax.random.split(key, 6)
    w1 = jax.random.normal(k1, (outchannels, inchannels, 3, 3), jnp.float32) * 0.1
    b1 = jax.random.normal(k2, (outchannels,), jnp.float32) * 0.1
    w2 = jax.random.normal(k3, (outchannels, outchannels, 3, 3), jnp.float32) * 0.1
    b2 = jax.random.normal(k4, (outchannels,), jnp.float32) * 0.1
    gamma = 1.0 + 0.1 * jax.random.normal(k5, (outchannels,), jnp.float32)
    beta = 0.1 * jax.random.normal(k6, (outchannels,), jnp.float32)
    return w1, b1, w2, b2, gamma, beta


if __name__ == "__main__":
    key = jax.random.PRNGKey(0)
    kx, kp, kd = jax.random.split(key, 3)

    N, Cin, Cout, H, W = 2, 4, 8, 16, 16
    x = jax.random.normal(kx, (N, Cin, H, W), jnp.float32)
    w1, b1, w2, b2, gamma, beta = init_params(kp, Cin, Cout)

    out = conv_block_forward(x, w1, b1, w2, b2, gamma, beta, kd)
    out = jax.block_until_ready(out)

    assert out.shape == (N, Cout, H, W)
    assert bool(jnp.all(jnp.isfinite(out)))
    print("KERNEL_OK")
</pallas_src>

<mosaic_0001>
module attributes {stable_mosaic.version = 11 : i64} {
  func.func @_conv_block_kernel(%arg0: memref<8x512xf32, #tpu.memory_space<vmem>>, %arg1: memref<8x72xbf16, #tpu.memory_space<vmem>>, %arg2: memref<8x1xf32, #tpu.memory_space<vmem>>, %arg3: memref<8x72xbf16, #tpu.memory_space<vmem>>, %arg4: memref<8x1xf32, #tpu.memory_space<vmem>>, %arg5: memref<8x1xf32, #tpu.memory_space<vmem>>, %arg6: memref<8x1xf32, #tpu.memory_space<vmem>>, %arg7: memref<9x512xf32, #tpu.memory_space<vmem>>, %arg8: memref<8x512xf32, #tpu.memory_space<vmem>>, %arg9: memref<8x512xf32, #tpu.memory_space<vmem>>) attributes {dimension_semantics = [], scalar_prefetch = 0 : i64, scratch_operands = 0 : i64, tpu.core_type = #tpu.core_type<tc>} {
    %c0 = arith.constant 0 : index
    %c0_0 = arith.constant 0 : index
    %0 = vector.load %arg0[%c0, %c0_0] : memref<8x512xf32, #tpu.memory_space<vmem>>, vector<8x512xf32>
    %c0_1 = arith.constant 0 : index
    %c0_2 = arith.constant 0 : index
    %1 = vector.load %arg1[%c0_1, %c0_2] : memref<8x72xbf16, #tpu.memory_space<vmem>>, vector<8x72xbf16>
    %cst = arith.constant 0.000000e+00 : f32
    %2 = vector.broadcast %cst : f32 to vector<8x17xf32>
    %3 = tpu.concatenate %2, %0, %2 in 1 : vector<8x17xf32>, vector<8x512xf32>, vector<8x17xf32> -> vector<8x546xf32>
    %4 = vector.extract_strided_slice %3 {offsets = [0, 0], sizes = [8, 512], strides = [1, 1]} : vector<8x546xf32> to vector<8x512xf32>
    %c0_3 = arith.constant 0 : index
    %c0_4 = arith.constant 0 : index
    %5 = vector.load %arg7[%c0_3, %c0_4] : memref<9x512xf32, #tpu.memory_space<vmem>>, vector<1x512xf32>
    %6 = vector.broadcast %5 : vector<1x512xf32> to vector<8x512xf32>
    %7 = arith.mulf %4, %6 : vector<8x512xf32>
    %8 = vector.extract_strided_slice %3 {offsets = [0, 1], sizes = [8, 512], strides = [1, 1]} : vector<8x546xf32> to vector<8x512xf32>
    %c1 = arith.constant 1 : index
    %c0_5 = arith.constant 0 : index
    %9 = vector.load %arg7[%c1, %c0_5] : memref<9x512xf32, #tpu.memory_space<vmem>>, vector<1x512xf32>
    %10 = vector.broadcast %9 : vector<1x512xf32> to vector<8x512xf32>
    %11 = arith.mulf %8, %10 : vector<8x512xf32>
    %12 = vector.extract_strided_slice %3 {offsets = [0, 2], sizes = [8, 512], strides = [1, 1]} : vector<8x546xf32> to vector<8x512xf32>
    %c2 = arith.constant 2 : index
    %c0_6 = arith.constant 0 : index
    %13 = vector.load %arg7[%c2, %c0_6] : memref<9x512xf32, #tpu.memory_space<vmem>>, vector<1x512xf32>
    %14 = vector.broadcast %13 : vector<1x512xf32> to vector<8x512xf32>
    %15 = arith.mulf %12, %14 : vector<8x512xf32>
    %16 = vector.extract_strided_slice %3 {offsets = [0, 16], sizes = [8, 512], strides = [1, 1]} : vector<8x546xf32> to vector<8x512xf32>
    %c3 = arith.constant 3 : index
    %c0_7 = arith.constant 0 : index
    %17 = vector.load %arg7[%c3, %c0_7] : memref<9x512xf32, #tpu.memory_space<vmem>>, vector<1x512xf32>
    %18 = vector.broadcast %17 : vector<1x512xf32> to vector<8x512xf32>
    %19 = arith.mulf %16, %18 : vector<8x512xf32>
    %20 = vector.extract_strided_slice %3 {offsets = [0, 17], sizes = [8, 512], strides = [1, 1]} : vector<8x546xf32> to vector<8x512xf32>
    %c4 = arith.constant 4 : index
    %c0_8 = arith.constant 0 : index
    %21 = vector.load %arg7[%c4, %c0_8] : memref<9x512xf32, #tpu.memory_space<vmem>>, vector<1x512xf32>
    %22 = vector.broadcast %21 : vector<1x512xf32> to vector<8x512xf32>
    %23 = arith.mulf %20, %22 : vector<8x512xf32>
    %24 = vector.extract_strided_slice %3 {offsets = [0, 18], sizes = [8, 512], strides = [1, 1]} : vector<8x546xf32> to vector<8x512xf32>
    %c5 = arith.constant 5 : index
    %c0_9 = arith.constant 0 : index
    %25 = vector.load %arg7[%c5, %c0_9] : memref<9x512xf32, #tpu.memory_space<vmem>>, vector<1x512xf32>
    %26 = vector.broadcast %25 : vector<1x512xf32> to vector<8x512xf32>
    %27 = arith.mulf %24, %26 : vector<8x512xf32>
    %28 = vector.extract_strided_slice %3 {offsets = [0, 32], sizes = [8, 512], strides = [1, 1]} : vector<8x546xf32> to vector<8x512xf32>
    %c6 = arith.constant 6 : index
    %c0_10 = arith.constant 0 : index
    %29 = vector.load %arg7[%c6, %c0_10] : memref<9x512xf32, #tpu.memory_space<vmem>>, vector<1x512xf32>
    %30 = vector.broadcast %29 : vector<1x512xf32> to vector<8x512xf32>
    %31 = arith.mulf %28, %30 : vector<8x512xf32>
    %32 = vector.extract_strided_slice %3 {offsets = [0, 33], sizes = [8, 512], strides = [1, 1]} : vector<8x546xf32> to vector<8x512xf32>
    %c7 = arith.constant 7 : index
    %c0_11 = arith.constant 0 : index
    %33 = vector.load %arg7[%c7, %c0_11] : memref<9x512xf32, #tpu.memory_space<vmem>>, vector<1x512xf32>
    %34 = vector.broadcast %33 : vector<1x512xf32> to vector<8x512xf32>
    %35 = arith.mulf %32, %34 : vector<8x512xf32>
    %36 = vector.extract_strided_slice %3 {offsets = [0, 34], sizes = [8, 512], strides = [1, 1]} : vector<8x546xf32> to vector<8x512xf32>
    %c8 = arith.constant 8 : index
    %c0_12 = arith.constant 0 : index
    %37 = vector.load %arg7[%c8, %c0_12] : memref<9x512xf32, #tpu.memory_space<vmem>>, vector<1x512xf32>
    %38 = vector.broadcast %37 : vector<1x512xf32> to vector<8x512xf32>
    %39 = arith.mulf %36, %38 : vector<8x512xf32>
    %40 = tpu.concatenate %7, %11, %15, %19, %23, %27, %31, %35, %39 in 0 : vector<8x512xf32>, vector<8x512xf32>, vector<8x512xf32>, vector<8x512xf32>, vector<8x512xf32>, vector<8x512xf32>, vector<8x512xf32>, vector<8x512xf32>, vector<8x512xf32> -> vector<72x512xf32>
    %41 = arith.truncf %40 : vector<72x512xf32> to vector<72x512xbf16>
    %cst_13 = arith.constant dense<0.000000e+00> : vector<8x512xf32>
    %42 = tpu.matmul %1, %41, %cst_13 {dimension_numbers = #tpu.dot_dimension_numbers<[1], [0], [0], [1], [0, 0, 1, 1], [], []>} : vector<8x72xbf16>, vector<72x512xbf16>, vector<8x512xf32> -> vector<8x512xf32>
    %c0_14 = arith.constant 0 : index
    %c0_15 = arith.constant 0 : index
    %43 = vector.load %arg2[%c0_14, %c0_15] : memref<8x1xf32, #tpu.memory_space<vmem>>, vector<8x1xf32>
    %44 = vector.broadcast %43 : vector<8x1xf32> to vector<8x512xf32>
    %45 = arith.addf %42, %44 : vector<8x512xf32>
    %cst_16 = arith.constant dense<0.000000e+00> : vector<8xf32>
    %46 = vector.multi_reduction <add>, %45, %cst_16 [1] : vector<8x512xf32> to vector<8xf32>
    %47 = vector.shape_cast %46 : vector<8xf32> to vector<8x1xf32>
    %48 = arith.mulf %45, %45 : vector<8x512xf32>
    %cst_17 = arith.constant dense<0.000000e+00> : vector<8xf32>
    %49 = vector.multi_reduction <add>, %48, %cst_17 [1] : vector<8x512xf32> to vector<8xf32>
    %50 = vector.shape_cast %49 : vector<8xf32> to vector<8x1xf32>
    %cst_18 = arith.constant 0.001953125 : f32
    %51 = vector.broadcast %cst_18 : f32 to vector<8x1xf32>
    %52 = arith.mulf %47, %51 : vector<8x1xf32>
    %cst_19 = arith.constant 0.001953125 : f32
    %53 = vector.broadcast %cst_19 : f32 to vector<8x1xf32>
    %54 = arith.mulf %50, %53 : vector<8x1xf32>
    %55 = arith.mulf %52, %52 : vector<8x1xf32>
    %56 = arith.subf %54, %55 : vector<8x1xf32>
    %cst_20 = arith.constant 0.000000e+00 : f32
    %57 = vector.broadcast %cst_20 : f32 to vector<8x1xf32>
    %58 = arith.maximumf %56, %57 : vector<8x1xf32>
    %cst_21 = arith.constant 9.99999974E-6 : f32
    %59 = vector.broadcast %cst_21 : f32 to vector<8x1xf32>
    %60 = arith.addf %58, %59 : vector<8x1xf32>
    %61 = math.rsqrt %60 : vector<8x1xf32>
    %c0_22 = arith.constant 0 : index
    %c0_23 = arith.constant 0 : index
    %62 = vector.load %arg5[%c0_22, %c0_23] : memref<8x1xf32, #tpu.memory_space<vmem>>, vector<8x1xf32>
    %63 = arith.mulf %61, %62 : vector<8x1xf32>
    %64 = vector.broadcast %52 : vector<8x1xf32> to vector<8x512xf32>
    %65 = arith.subf %45, %64 : vector<8x512xf32>
    %66 = vector.broadcast %63 : vector<8x1xf32> to vector<8x512xf32>
    %67 = arith.mulf %65, %66 : vector<8x512xf32>
    %c0_24 = arith.constant 0 : index
    %c0_25 = arith.constant 0 : index
    %68 = vector.load %arg6[%c0_24, %c0_25] : memref<8x1xf32, #tpu.memory_space<vmem>>, vector<8x1xf32>
    %69 = vector.broadcast %68 : vector<8x1xf32> to vector<8x512xf32>
    %70 = arith.addf %67, %69 : vector<8x512xf32>
    %cst_26 = arith.constant 0.000000e+00 : f32
    %71 = vector.broadcast %cst_26 : f32 to vector<8x512xf32>
    %72 = arith.cmpf oge, %70, %71 : vector<8x512xf32>
    %cst_27 = arith.constant 0.00999999977 : f32
    %73 = vector.broadcast %cst_27 : f32 to vector<8x512xf32>
    %74 = arith.mulf %73, %70 : vector<8x512xf32>
    %75 = arith.select %72, %70, %74 : vector<8x512xi1>, vector<8x512xf32>
    %c0_28 = arith.constant 0 : index
    %c0_29 = arith.constant 0 : index
    %76 = vector.load %arg3[%c0_28, %c0_29] : memref<8x72xbf16, #tpu.memory_space<vmem>>, vector<8x72xbf16>
    %cst_30 = arith.constant 0.000000e+00 : f32
    %77 = vector.broadcast %cst_30 : f32 to vector<8x17xf32>
    %78 = tpu.concatenate %77, %75, %77 in 1 : vector<8x17xf32>, vector<8x512xf32>, vector<8x17xf32> -> vector<8x546xf32>
    %79 = vector.extract_strided_slice %78 {offsets = [0, 0], sizes = [8, 512], strides = [1, 1]} : vector<8x546xf32> to vector<8x512xf32>
    %c0_31 = arith.constant 0 : index
    %c0_32 = arith.constant 0 : index
    %80 = vector.load %arg7[%c0_31, %c0_32] : memref<9x512xf32, #tpu.memory_space<vmem>>, vector<1x512xf32>
    %81 = vector.broadcast %80 : vector<1x512xf32> to vector<8x512xf32>
    %82 = arith.mulf %79, %81 : vector<8x512xf32>
    %83 = vector.extract_strided_slice %78 {offsets = [0, 1], sizes = [8, 512], strides = [1, 1]} : vector<8x546xf32> to vector<8x512xf32>
    %c1_33 = arith.constant 1 : index
    %c0_34 = arith.constant 0 : index
    %84 = vector.load %arg7[%c1_33, %c0_34] : memref<9x512xf32, #tpu.memory_space<vmem>>, vector<1x512xf32>
    %85 = vector.broadcast %84 : vector<1x512xf32> to vector<8x512xf32>
    %86 = arith.mulf %83, %85 : vector<8x512xf32>
    %87 = vector.extract_strided_slice %78 {offsets = [0, 2], sizes = [8, 512], strides = [1, 1]} : vector<8x546xf32> to vector<8x512xf32>
    %c2_35 = arith.constant 2 : index
    %c0_36 = arith.constant 0 : index
    %88 = vector.load %arg7[%c2_35, %c0_36] : memref<9x512xf32, #tpu.memory_space<vmem>>, vector<1x512xf32>
    %89 = vector.broadcast %88 : vector<1x512xf32> to vector<8x512xf32>
    %90 = arith.mulf %87, %89 : vector<8x512xf32>
    %91 = vector.extract_strided_slice %78 {offsets = [0, 16], sizes = [8, 512], strides = [1, 1]} : vector<8x546xf32> to vector<8x512xf32>
    %c3_37 = arith.constant 3 : index
    %c0_38 = arith.constant 0 : index
    %92 = vector.load %arg7[%c3_37, %c0_38] : memref<9x512xf32, #tpu.memory_space<vmem>>, vector<1x512xf32>
    %93 = vector.broadcast %92 : vector<1x512xf32> to vector<8x512xf32>
    %94 = arith.mulf %91, %93 : vector<8x512xf32>
    %95 = vector.extract_strided_slice %78 {offsets = [0, 17], sizes = [8, 512], strides = [1, 1]} : vector<8x546xf32> to vector<8x512xf32>
    %c4_39 = arith.constant 4 : index
    %c0_40 = arith.constant 0 : index
    %96 = vector.load %arg7[%c4_39, %c0_40] : memref<9x512xf32, #tpu.memory_space<vmem>>, vector<1x512xf32>
    %97 = vector.broadcast %96 : vector<1x512xf32> to vector<8x512xf32>
    %98 = arith.mulf %95, %97 : vector<8x512xf32>
    %99 = vector.extract_strided_slice %78 {offsets = [0, 18], sizes = [8, 512], strides = [1, 1]} : vector<8x546xf32> to vector<8x512xf32>
    %c5_41 = arith.constant 5 : index
    %c0_42 = arith.constant 0 : index
    %100 = vector.load %arg7[%c5_41, %c0_42] : memref<9x512xf32, #tpu.memory_space<vmem>>, vector<1x512xf32>
    %101 = vector.broadcast %100 : vector<1x512xf32> to vector<8x512xf32>
    %102 = arith.mulf %99, %101 : vector<8x512xf32>
    %103 = vector.extract_strided_slice %78 {offsets = [0, 32], sizes = [8, 512], strides = [1, 1]} : vector<8x546xf32> to vector<8x512xf32>
    %c6_43 = arith.constant 6 : index
    %c0_44 = arith.constant 0 : index
    %104 = vector.load %arg7[%c6_43, %c0_44] : memref<9x512xf32, #tpu.memory_space<vmem>>, vector<1x512xf32>
    %105 = vector.broadcast %104 : vector<1x512xf32> to vector<8x512xf32>
    %106 = arith.mulf %103, %105 : vector<8x512xf32>
    %107 = vector.extract_strided_slice %78 {offsets = [0, 33], sizes = [8, 512], strides = [1, 1]} : vector<8x546xf32> to vector<8x512xf32>
    %c7_45 = arith.constant 7 : index
    %c0_46 = arith.constant 0 : index
    %108 = vector.load %arg7[%c7_45, %c0_46] : memref<9x512xf32, #tpu.memory_space<vmem>>, vector<1x512xf32>
    %109 = vector.broadcast %108 : vector<1x512xf32> to vector<8x512xf32>
    %110 = arith.mulf %107, %109 : vector<8x512xf32>
    %111 = vector.extract_strided_slice %78 {offsets = [0, 34], sizes = [8, 512], strides = [1, 1]} : vector<8x546xf32> to vector<8x512xf32>
    %c8_47 = arith.constant 8 : index
    %c0_48 = arith.constant 0 : index
    %112 = vector.load %arg7[%c8_47, %c0_48] : memref<9x512xf32, #tpu.memory_space<vmem>>, vector<1x512xf32>
    %113 = vector.broadcast %112 : vector<1x512xf32> to vector<8x512xf32>
    %114 = arith.mulf %111, %113 : vector<8x512xf32>
    %115 = tpu.concatenate %82, %86, %90, %94, %98, %102, %106, %110, %114 in 0 : vector<8x512xf32>, vector<8x512xf32>, vector<8x512xf32>, vector<8x512xf32>, vector<8x512xf32>, vector<8x512xf32>, vector<8x512xf32>, vector<8x512xf32>, vector<8x512xf32> -> vector<72x512xf32>
    %116 = arith.truncf %115 : vector<72x512xf32> to vector<72x512xbf16>
    %cst_49 = arith.constant dense<0.000000e+00> : vector<8x512xf32>
    %117 = tpu.matmul %76, %116, %cst_49 {dimension_numbers = #tpu.dot_dimension_numbers<[1], [0], [0], [1], [0, 0, 1, 1], [], []>} : vector<8x72xbf16>, vector<72x512xbf16>, vector<8x512xf32> -> vector<8x512xf32>
    %c0_50 = arith.constant 0 : index
    %c0_51 = arith.constant 0 : index
    %118 = vector.load %arg4[%c0_50, %c0_51] : memref<8x1xf32, #tpu.memory_space<vmem>>, vector<8x1xf32>
    %119 = vector.broadcast %118 : vector<8x1xf32> to vector<8x512xf32>
    %120 = arith.addf %117, %119 : vector<8x512xf32>
    %cst_52 = arith.constant dense<0.000000e+00> : vector<8xf32>
    %121 = vector.multi_reduction <add>, %120, %cst_52 [1] : vector<8x512xf32> to vector<8xf32>
    %122 = vector.shape_cast %121 : vector<8xf32> to vector<8x1xf32>
    %123 = arith.mulf %120, %120 : vector<8x512xf32>
    %cst_53 = arith.constant dense<0.000000e+00> : vector<8xf32>
    %124 = vector.multi_reduction <add>, %123, %cst_53 [1] : vector<8x512xf32> to vector<8xf32>
    %125 = vector.shape_cast %124 : vector<8xf32> to vector<8x1xf32>
    %cst_54 = arith.constant 0.001953125 : f32
    %126 = vector.broadcast %cst_54 : f32 to vector<8x1xf32>
    %127 = arith.mulf %122, %126 : vector<8x1xf32>
    %cst_55 = arith.constant 0.001953125 : f32
    %128 = vector.broadcast %cst_55 : f32 to vector<8x1xf32>
    %129 = arith.mulf %125, %128 : vector<8x1xf32>
    %130 = arith.mulf %127, %127 : vector<8x1xf32>
    %131 = arith.subf %129, %130 : vector<8x1xf32>
    %cst_56 = arith.constant 0.000000e+00 : f32
    %132 = vector.broadcast %cst_56 : f32 to vector<8x1xf32>
    %133 = arith.maximumf %131, %132 : vector<8x1xf32>
    %cst_57 = arith.constant 9.99999974E-6 : f32
    %134 = vector.broadcast %cst_57 : f32 to vector<8x1xf32>
    %135 = arith.addf %133, %134 : vector<8x1xf32>
    %136 = math.rsqrt %135 : vector<8x1xf32>
    %c0_58 = arith.constant 0 : index
    %c0_59 = arith.constant 0 : index
    %137 = vector.load %arg5[%c0_58, %c0_59] : memref<8x1xf32, #tpu.memory_space<vmem>>, vector<8x1xf32>
    %138 = arith.mulf %136, %137 : vector<8x1xf32>
    %139 = vector.broadcast %127 : vector<8x1xf32> to vector<8x512xf32>
    %140 = arith.subf %120, %139 : vector<8x512xf32>
    %141 = vector.broadcast %138 : vector<8x1xf32> to vector<8x512xf32>
    %142 = arith.mulf %140, %141 : vector<8x512xf32>
    %c0_60 = arith.constant 0 : index
    %c0_61 = arith.constant 0 : index
    %143 = vector.load %arg6[%c0_60, %c0_61] : memref<8x1xf32, #tpu.memory_space<vmem>>, vector<8x1xf32>
    %144 = vector.broadcast %143 : vector<8x1xf32> to vector<8x512xf32>
    %145 = arith.addf %142, %144 : vector<8x512xf32>
    %cst_62 = arith.constant 0.000000e+00 : f32
    %146 = vector.broadcast %cst_62 : f32 to vector<8x512xf32>
    %147 = arith.cmpf oge, %145, %146 : vector<8x512xf32>
    %cst_63 = arith.constant 0.00999999977 : f32
    %148 = vector.broadcast %cst_63 : f32 to vector<8x512xf32>
    %149 = arith.mulf %148, %145 : vector<8x512xf32>
    %150 = arith.select %147, %145, %149 : vector<8x512xi1>, vector<8x512xf32>
    %c0_64 = arith.constant 0 : index
    %c0_65 = arith.constant 0 : index
    %151 = vector.load %arg8[%c0_64, %c0_65] : memref<8x512xf32, #tpu.memory_space<vmem>>, vector<8x512xf32>
    %152 = arith.mulf %150, %151 : vector<8x512xf32>
    %c0_66 = arith.constant 0 : index
    %c0_67 = arith.constant 0 : index
    %153 = vector.load %arg9[%c0_66, %c0_67] : memref<8x512xf32, #tpu.memory_space<vmem>>, vector<8x512xf32>
    tpu.vector_store %arg9[%c0_66, %c0_67], %152 {strides = array<i32>} : memref<8x512xf32, #tpu.memory_space<vmem>>, vector<8x512xf32>,
    return
  }
}

</mosaic_0001>

<llo_original>
// kernel: conv_block_forward.1
$region0: #{conv_block_forward.1}
  #allocation0 [shape = 'u32[]', space=smem, size = 0x4, offset = 0x4, fixed_abs, tag = 'smem constant byte address 0x4 - core index']
  #allocation1 [shape = 'u32[144,128]{1,0:T(1,128)}', space=vmem, size = 0x12000, scoped, tag = 'internal scratch']
  %s0 = inlined_call_operand.vmem [shape: f32[8,512], index: 0, kind: input, shape index: {}]
  %s1 = inlined_call_operand.vmem [shape: bf16[8,72], index: 1, kind: input, shape index: {}]
  %s2 = inlined_call_operand.vmem [shape: f32[8,1], index: 2, kind: input, shape index: {}]
  %s3 = inlined_call_operand.vmem [shape: bf16[8,72], index: 3, kind: input, shape index: {}]
  %s4 = inlined_call_operand.vmem [shape: f32[8,1], index: 4, kind: input, shape index: {}]
  %s5 = inlined_call_operand.vmem [shape: f32[8,1], index: 5, kind: input, shape index: {}]
  %s6 = inlined_call_operand.vmem [shape: f32[8,1], index: 6, kind: input, shape index: {}]
  %s7 = inlined_call_operand.vmem [shape: f32[9,512], index: 7, kind: input, shape index: {}]
  %s8 = inlined_call_operand.vmem [shape: f32[8,512], index: 8, kind: input, shape index: {}]
  %s9 = inlined_call_operand.vmem [shape: f32[8,512], index: 9, kind: output, shape index: {}]
  %s10 = sld [smem:[#allocation0]]
  $region46: #{conv_block_forward.1} parent=0
    _
  %s12 = ssub.s32 1, %s10
  %s13 = scalar_select 0, %s12, %s10
  // Predicated region
  $region2: #{conv_block_forward.1} parent=0 // pred_check
    _
  $region3: #{conv_block_forward.1} parent=0 // pred_check_branch
    %15 = sbr.rel (0) target = $region5
  $region4: #{conv_block_forward.1} parent=0 // pred_region
    _
  $region5: #{conv_block_forward.1} parent=0 // pred_fallthru
    _
  // Predicated region
  $region6: #{conv_block_forward.1} parent=0 // pred_check
    _
  $region7: #{conv_block_forward.1} parent=0 // pred_check_branch
    %17 = sbr.rel (0) target = $region9
  $region8: #{conv_block_forward.1} parent=0 // pred_region
    _
  $region9: #{conv_block_forward.1} parent=0 // pred_fallthru
    _
  // Predicated region
  $region10: #{conv_block_forward.1} parent=0 // pred_check
    _
  $region11: #{conv_block_forward.1} parent=0 // pred_check_branch
    %19 = sbr.rel (0) target = $region13
  $region12: #{conv_block_forward.1} parent=0 // pred_region
    _
  $region13: #{conv_block_forward.1} parent=0 // pred_fallthru
    _
  // Predicated region
  $region14: #{conv_block_forward.1} parent=0 // pred_check
    _
  $region15: #{conv_block_forward.1} parent=0 // pred_check_branch
    %21 = sbr.rel (0) target = $region17
  $region16: #{conv_block_forward.1} parent=0 // pred_region
    _
  $region17: #{conv_block_forward.1} parent=0 // pred_fallthru
    _
  // Predicated region
  $region18: #{conv_block_forward.1} parent=0 // pred_check
    _
  $region19: #{conv_block_forward.1} parent=0 // pred_check_branch
    %23 = sbr.rel (0) target = $region21
  $region20: #{conv_block_forward.1} parent=0 // pred_region
    _
  $region21: #{conv_block_forward.1} parent=0 // pred_fallthru
    _
  // Predicated region
  $region22: #{conv_block_forward.1} parent=0 // pred_check
    _
  $region23: #{conv_block_forward.1} parent=0 // pred_check_branch
    %25 = sbr.rel (0) target = $region25
  $region24: #{conv_block_forward.1} parent=0 // pred_region
    _
  $region25: #{conv_block_forward.1} parent=0 // pred_fallthru
    _
  // Predicated region
  $region26: #{conv_block_forward.1} parent=0 // pred_check
    _
  $region27: #{conv_block_forward.1} parent=0 // pred_check_branch
    %27 = sbr.rel (0) target = $region29
  $region28: #{conv_block_forward.1} parent=0 // pred_region
    _
  $region29: #{conv_block_forward.1} parent=0 // pred_fallthru
    _
  // Predicated region
  $region30: #{conv_block_forward.1} parent=0 // pred_check
    _
  $region31: #{conv_block_forward.1} parent=0 // pred_check_branch
    %29 = sbr.rel (0) target = $region33
  $region32: #{conv_block_forward.1} parent=0 // pred_region
    _
  $region33: #{conv_block_forward.1} parent=0 // pred_fallthru
    _
  // Predicated region
  $region34: #{conv_block_forward.1} parent=0 // pred_check
    _
  $region35: #{conv_block_forward.1} parent=0 // pred_check_branch
    %31 = sbr.rel (0) target = $region37
  $region36: #{conv_block_forward.1} parent=0 // pred_region
    _
  $region37: #{conv_block_forward.1} parent=0 // pred_fallthru
    _
  %v33 = vld [vmem:[%s0] sm:$0xff]
  %v34 = vld [vmem:[%s0 + $0x8] sm:$0xff]
  %v35 = vld [vmem:[%s0 + $0x10] sm:$0xff]
  %v36 = vld [vmem:[%s0 + $0x18] sm:$0xff]
  %v37 = vld [vmem:[%s1] sm:$0xf]
  %42 = vrot.lane.b32.xlu0 %v33, 17
  %v43 = vpop.permute.xlu0 %42
  %44 = vrot.lane.b32.xlu0 %v34, 17
  %v45 = vpop.permute.xlu0 %44
  %46 = vrot.lane.b32.xlu0 %v35, 17
  %v47 = vpop.permute.xlu0 %46
  %48 = vrot.lane.b32.xlu0 %v36, 17
  %v49 = vpop.permute.xlu0 %48
  %vm50 = vcmask 138240
  %v51 = vsel %vm50, %v43, %v45
  %v52 = vsel %vm50, %v45, %v47
  %v53 = vsel %vm50, %v47, %v49
  %v59 = vsel %vm50, 0.0, %v43
  %v60 = vsel %vm50, %v49, 0.0
  %v61 = vld [vmem:[%s7] ss:$8 sm:$0xf]
  %v63 = vlaneseq
  %v64 = vshrl.u32 %v63, 7
  %v65 = vsub.s32 0, %v64
  %v66 = vrot.slane %v61, %v65
  %v67 = vlaneseq
  %v68 = vshrl.u32 %v67, 7
  %v69 = vsub.s32 1, %v68
  %v70 = vrot.slane %v61, %v69
  %v71 = vlaneseq
  %v72 = vshrl.u32 %v71, 7
  %v73 = vsub.s32 2, %v72
  %v74 = vrot.slane %v61, %v73
  %v75 = vlaneseq
  %v76 = vshrl.u32 %v75, 7
  %v77 = vsub.s32 3, %v76
  %v78 = vrot.slane %v61, %v77
  %v83 = vmul.f32 %v59, %v66
  %v84 = vmul.f32 %v51, %v70
  %v85 = vmul.f32 %v52, %v74
  %v86 = vmul.f32 %v53, %v78
  %s87 = scalar_lea.vmem %s7, 1
  %v88 = vld [vmem:[%s87] ss:$8 sm:$0xf]
  %v90 = vlaneseq
  %v91 = vshrl.u32 %v90, 7
  %v92 = vsub.s32 0, %v91
  %v93 = vrot.slane %v88, %v92
  %v94 = vlaneseq
  %v95 = vshrl.u32 %v94, 7
  %v96 = vsub.s32 1, %v95
  %v97 = vrot.slane %v88, %v96
  %v98 = vlaneseq
  %v99 = vshrl.u32 %v98, 7
  %v100 = vsub.s32 2, %v99
  %v101 = vrot.slane %v88, %v100
  %v102 = vlaneseq
  %v103 = vshrl.u32 %v102, 7
  %v104 = vsub.s32 3, %v103
  %v105 = vrot.slane %v88, %v104
  %106 = vrot.lane.b32.xlu0 %v93, 1
  %v107 = vpop.permute.xlu0 %106
  %108 = vrot.lane.b32.xlu0 %v97, 1
  %v109 = vpop.permute.xlu0 %108
  %110 = vrot.lane.b32.xlu0 %v101, 1
  %v111 = vpop.permute.xlu0 %110
  %112 = vrot.lane.b32.xlu0 %v105, 1
  %v113 = vpop.permute.xlu0 %112
  %vm114 = vcmask 7168
  %v115 = vsel %vm114, %v107, %v109
  %v116 = vsel %vm114, %v109, %v111
  %v117 = vsel %vm114, %v111, %v113
  %v123 = vmul.f32 %v59, %v107
  %v124 = vmul.f32 %v51, %v115
  %v125 = vmul.f32 %v52, %v116
  %v126 = vmul.f32 %v53, %v117
  %v127 = vmul.f32 %v60, %v113
  %s128 = scalar_lea.vmem %s7, 2
  %v129 = vld [vmem:[%s128] ss:$8 sm:$0xf]
  %v131 = vlaneseq
  %v132 = vshrl.u32 %v131, 7
  %v133 = vsub.s32 0, %v132
  %v134 = vrot.slane %v129, %v133
  %v135 = vlaneseq
  %v136 = vshrl.u32 %v135, 7
  %v137 = vsub.s32 1, %v136
  %v138 = vrot.slane %v129, %v137
  %v139 = vlaneseq
  %v140 = vshrl.u32 %v139, 7
  %v141 = vsub.s32 2, %v140
  %v142 = vrot.slane %v129, %v141
  %v143 = vlaneseq
  %v144 = vshrl.u32 %v143, 7
  %v145 = vsub.s32 3, %v144
  %v146 = vrot.slane %v129, %v145
  %147 = vrot.lane.b32.xlu0 %v134, 2
  %v148 = vpop.permute.xlu0 %147
  %149 = vrot.lane.b32.xlu0 %v138, 2
  %v150 = vpop.permute.xlu0 %149
  %151 = vrot.lane.b32.xlu0 %v142, 2
  %v152 = vpop.permute.xlu0 %151
  %153 = vrot.lane.b32.xlu0 %v146, 2
  %v154 = vpop.permute.xlu0 %153
  %vm155 = vcmask 15360
  %v156 = vsel %vm155, %v148, %v150
  %v157 = vsel %vm155, %v150, %v152
  %v158 = vsel %vm155, %v152, %v154
  %v164 = vmul.f32 %v59, %v148
  %v165 = vmul.f32 %v51, %v156
  %v166 = vmul.f32 %v52, %v157
  %v167 = vmul.f32 %v53, %v158
  %v168 = vmul.f32 %v60, %v154
  %s169 = scalar_lea.vmem %s7, 3
  %v170 = vld [vmem:[%s169] ss:$8 sm:$0xf]
  %v172 = vlaneseq
  %v173 = vshrl.u32 %v172, 7
  %v174 = vsub.s32 0, %v173
  %v175 = vrot.slane %v170, %v174
  %v176 = vlaneseq
  %v177 = vshrl.u32 %v176, 7
  %v178 = vsub.s32 1, %v177
  %v179 = vrot.slane %v170, %v178
  %v180 = vlaneseq
  %v181 = vshrl.u32 %v180, 7
  %v182 = vsub.s32 2, %v181
  %v183 = vrot.slane %v170, %v182
  %v184 = vlaneseq
  %v185 = vshrl.u32 %v184, 7
  %v186 = vsub.s32 3, %v185
  %v187 = vrot.slane %v170, %v186
  %188 = vrot.lane.b32.xlu0 %v175, 16
  %v189 = vpop.permute.xlu0 %188
  %190 = vrot.lane.b32.xlu0 %v179, 16
  %v191 = vpop.permute.xlu0 %190
  %192 = vrot.lane.b32.xlu0 %v183, 16
  %v193 = vpop.permute.xlu0 %192
  %194 = vrot.lane.b32.xlu0 %v187, 16
  %v195 = vpop.permute.xlu0 %194
  %vm196 = vcmask 130048
  %v197 = vsel %vm196, %v189, %v191
  %v198 = vsel %vm196, %v191, %v193
  %v199 = vsel %vm196, %v193, %v195
  %v205 = vmul.f32 %v59, %v189
  %v206 = vmul.f32 %v51, %v197
  %v207 = vmul.f32 %v52, %v198
  %v208 = vmul.f32 %v53, %v199
  %v209 = vmul.f32 %v60, %v195
  %s210 = scalar_lea.vmem %s7, 4
  %v211 = vld [vmem:[%s210] ss:$8 sm:$0xf]
  %v213 = vlaneseq
  %v214 = vshrl.u32 %v213, 7
  %v215 = vsub.s32 0, %v214
  %v216 = vrot.slane %v211, %v215
  %v217 = vlaneseq
  %v218 = vshrl.u32 %v217, 7
  %v219 = vsub.s32 1, %v218
  %v220 = vrot.slane %v211, %v219
  %v221 = vlaneseq
  %v222 = vshrl.u32 %v221, 7
  %v223 = vsub.s32 2, %v222
  %v224 = vrot.slane %v211, %v223
  %v225 = vlaneseq
  %v226 = vshrl.u32 %v225, 7
  %v227 = vsub.s32 3, %v226
  %v228 = vrot.slane %v211, %v227
  %229 = vrot.lane.b32.xlu0 %v216, 17
  %v230 = vpop.permute.xlu0 %229
  %231 = vrot.lane.b32.xlu0 %v220, 17
  %v232 = vpop.permute.xlu0 %231
  %233 = vrot.lane.b32.xlu0 %v224, 17
  %v234 = vpop.permute.xlu0 %233
  %235 = vrot.lane.b32.xlu0 %v228, 17
  %v236 = vpop.permute.xlu0 %235
  %v237 = vsel %vm50, %v230, %v232
  %v238 = vsel %vm50, %v232, %v234
  %v239 = vsel %vm50, %v234, %v236
  %v245 = vmul.f32 %v59, %v230
  %v246 = vmul.f32 %v51, %v237
  %v247 = vmul.f32 %v52, %v238
  %v248 = vmul.f32 %v53, %v239
  %v249 = vmul.f32 %v60, %v236
  %s250 = scalar_lea.vmem %s7, 5
  %v251 = vld [vmem:[%s250] ss:$8 sm:$0xf]
  %v253 = vlaneseq
  %v254 = vshrl.u32 %v253, 7
  %v255 = vsub.s32 0, %v254
  %v256 = vrot.slane %v251, %v255
  %v257 = vlaneseq
  %v258 = vshrl.u32 %v257, 7
  %v259 = vsub.s32 1, %v258
  %v260 = vrot.slane %v251, %v259
  %v261 = vlaneseq
  %v262 = vshrl.u32 %v261, 7
  %v263 = vsub.s32 2, %v262
  %v264 = vrot.slane %v251, %v263
  %v265 = vlaneseq
  %v266 = vshrl.u32 %v265, 7
  %v267 = vsub.s32 3, %v266
  %v268 = vrot.slane %v251, %v267
  %269 = vrot.lane.b32.xlu0 %v256, 18
  %v270 = vpop.permute.xlu0 %269
  %271 = vrot.lane.b32.xlu0 %v260, 18
  %v272 = vpop.permute.xlu0 %271
  %273 = vrot.lane.b32.xlu0 %v264, 18
  %v274 = vpop.permute.xlu0 %273
  %275 = vrot.lane.b32.xlu0 %v268, 18
  %v276 = vpop.permute.xlu0 %275
  %vm277 = vcmask 146432
  %v278 = vsel %vm277, %v270, %v272
  %v279 = vsel %vm277, %v272, %v274
  %v280 = vsel %vm277, %v274, %v276
  %v286 = vmul.f32 %v59, %v270
  %v287 = vmul.f32 %v51, %v278
  %v288 = vmul.f32 %v52, %v279
  %v289 = vmul.f32 %v53, %v280
  %v290 = vmul.f32 %v60, %v276
  %s291 = scalar_lea.vmem %s7, 6
  %v292 = vld [vmem:[%s291] ss:$8 sm:$0xf]
  %v294 = vlaneseq
  %v295 = vshrl.u32 %v294, 7
  %v296 = vsub.s32 0, %v295
  %v297 = vrot.slane %v292, %v296
  %v298 = vlaneseq
  %v299 = vshrl.u32 %v298, 7
  %v300 = vsub.s32 1, %v299
  %v301 = vrot.slane %v292, %v300
  %v302 = vlaneseq
  %v303 = vshrl.u32 %v302, 7
  %v304 = vsub.s32 2, %v303
  %v305 = vrot.slane %v292, %v304
  %v306 = vlaneseq
  %v307 = vshrl.u32 %v306, 7
  %v308 = vsub.s32 3, %v307
  %v309 = vrot.slane %v292, %v308
  %310 = vrot.lane.b32.xlu0 %v297, 32
  %v311 = vpop.permute.xlu0 %310
  %312 = vrot.lane.b32.xlu0 %v301, 32
  %v313 = vpop.permute.xlu0 %312
  %314 = vrot.lane.b32.xlu0 %v305, 32
  %v315 = vpop.permute.xlu0 %314
  %316 = vrot.lane.b32.xlu0 %v309, 32
  %v317 = vpop.permute.xlu0 %316
  %vm318 = vcmask 261120
  %v319 = vsel %vm318, %v311, %v313
  %v320 = vsel %vm318, %v313, %v315
  %v321 = vsel %vm318, %v315, %v317
  %v327 = vmul.f32 %v59, %v311
  %v328 = vmul.f32 %v51, %v319
  %v329 = vmul.f32 %v52, %v320
  %v330 = vmul.f32 %v53, %v321
  %v331 = vmul.f32 %v60, %v317
  %s332 = scalar_lea.vmem %s7, 7
  %v333 = vld [vmem:[%s332] ss:$8 sm:$0xf]
  %v335 = vlaneseq
  %v336 = vshrl.u32 %v335, 7
  %v337 = vsub.s32 0, %v336
  %v338 = vrot.slane %v333, %v337
  %v339 = vlaneseq
  %v340 = vshrl.u32 %v339, 7
  %v341 = vsub.s32 1, %v340
  %v342 = vrot.slane %v333, %v341
  %v343 = vlaneseq
  %v344 = vshrl.u32 %v343, 7
  %v345 = vsub.s32 2, %v344
  %v346 = vrot.slane %v333, %v345
  %v347 = vlaneseq
  %v348 = vshrl.u32 %v347, 7
  %v349 = vsub.s32 3, %v348
  %v350 = vrot.slane %v333, %v349
  %351 = vrot.lane.b32.xlu0 %v338, 33
  %v352 = vpop.permute.xlu0 %351
  %353 = vrot.lane.b32.xlu0 %v342, 33
  %v354 = vpop.permute.xlu0 %353
  %355 = vrot.lane.b32.xlu0 %v346, 33
  %v356 = vpop.permute.xlu0 %355
  %357 = vrot.lane.b32.xlu0 %v350, 33
  %v358 = vpop.permute.xlu0 %357
  %vm359 = vcmask 269312
  %v360 = vsel %vm359, %v352, %v354
  %v361 = vsel %vm359, %v354, %v356
  %v362 = vsel %vm359, %v356, %v358
  %v368 = vmul.f32 %v59, %v352
  %v369 = vmul.f32 %v51, %v360
  %v370 = vmul.f32 %v52, %v361
  %v371 = vmul.f32 %v53, %v362
  %v372 = vmul.f32 %v60, %v358
  %s373 = scalar_lea.vmem %s7, 32
  %v374 = vld [vmem:[%s373] ss:$8 sm:$0xf]
  %v376 = vlaneseq
  %v377 = vshrl.u32 %v376, 7
  %v378 = vsub.s32 0, %v377
  %v379 = vrot.slane %v374, %v378
  %v380 = vlaneseq
  %v381 = vshrl.u32 %v380, 7
  %v382 = vsub.s32 1, %v381
  %v383 = vrot.slane %v374, %v382
  %v384 = vlaneseq
  %v385 = vshrl.u32 %v384, 7
  %v386 = vsub.s32 2, %v385
  %v387 = vrot.slane %v374, %v386
  %v388 = vlaneseq
  %v389 = vshrl.u32 %v388, 7
  %v390 = vsub.s32 3, %v389
  %v391 = vrot.slane %v374, %v390
  %392 = vrot.lane.b32.xlu0 %v379, 34
  %v393 = vpop.permute.xlu0 %392
  %394 = vrot.lane.b32.xlu0 %v383, 34
  %v395 = vpop.permute.xlu0 %394
  %396 = vrot.lane.b32.xlu0 %v387, 34
  %v397 = vpop.permute.xlu0 %396
  %398 = vrot.lane.b32.xlu0 %v391, 34
  %v399 = vpop.permute.xlu0 %398
  %vm400 = vcmask 277504
  %v401 = vsel %vm400, %v393, %v395
  %v402 = vsel %vm400, %v395, %v397
  %v403 = vsel %vm400, %v397, %v399
  %v409 = vmul.f32 %v59, %v393
  %v410 = vmul.f32 %v51, %v401
  %v411 = vmul.f32 %v52, %v402
  %v412 = vmul.f32 %v53, %v403
  %v413 = vmul.f32 %v60, %v399
  %419 = vrot.lane.b32.xlu0 %v123, 127
  %v420 = vpop.permute.xlu0 %419
  %421 = vrot.lane.b32.xlu0 %v124, 127
  %v422 = vpop.permute.xlu0 %421
  %423 = vrot.lane.b32.xlu0 %v125, 127
  %v424 = vpop.permute.xlu0 %423
  %425 = vrot.lane.b32.xlu0 %v126, 127
  %v426 = vpop.permute.xlu0 %425
  %427 = vrot.lane.b32.xlu0 %v127, 127
  %v428 = vpop.permute.xlu0 %427
  %vm429 = vcmask 1039360
  %v430 = vsel %vm429, %v420, %v422
  %v431 = vsel %vm429, %v422, %v424
  %v432 = vsel %vm429, %v424, %v426
  %v433 = vsel %vm429, %v426, %v428
  %443 = vrot.lane.b32.xlu0 %v164, 126
  %v444 = vpop.permute.xlu0 %443
  %445 = vrot.lane.b32.xlu0 %v165, 126
  %v446 = vpop.permute.xlu0 %445
  %447 = vrot.lane.b32.xlu0 %v166, 126
  %v448 = vpop.permute.xlu0 %447
  %449 = vrot.lane.b32.xlu0 %v167, 126
  %v450 = vpop.permute.xlu0 %449
  %451 = vrot.lane.b32.xlu0 %v168, 126
  %v452 = vpop.permute.xlu0 %451
  %vm453 = vcmask 1031168
  %v454 = vsel %vm453, %v444, %v446
  %v455 = vsel %vm453, %v446, %v448
  %v456 = vsel %vm453, %v448, %v450
  %v457 = vsel %vm453, %v450, %v452
  %467 = vrot.lane.b32.xlu0 %v205, 112
  %v468 = vpop.permute.xlu0 %467
  %469 = vrot.lane.b32.xlu0 %v206, 112
  %v470 = vpop.permute.xlu0 %469
  %471 = vrot.lane.b32.xlu0 %v207, 112
  %v472 = vpop.permute.xlu0 %471
  %473 = vrot.lane.b32.xlu0 %v208, 112
  %v474 = vpop.permute.xlu0 %473
  %475 = vrot.lane.b32.xlu0 %v209, 112
  %v476 = vpop.permute.xlu0 %475
  %vm477 = vcmask 916480
  %v478 = vsel %vm477, %v468, %v470
  %v479 = vsel %vm477, %v470, %v472
  %v480 = vsel %vm477, %v472, %v474
  %v481 = vsel %vm477, %v474, %v476
  %491 = vrot.lane.b32.xlu0 %v245, 111
  %v492 = vpop.permute.xlu0 %491
  %493 = vrot.lane.b32.xlu0 %v246, 111
  %v494 = vpop.permute.xlu0 %493
  %495 = vrot.lane.b32.xlu0 %v247, 111
  %v496 = vpop.permute.xlu0 %495
  %497 = vrot.lane.b32.xlu0 %v248, 111
  %v498 = vpop.permute.xlu0 %497
  %499 = vrot.lane.b32.xlu0 %v249, 111
  %v500 = vpop.permute.xlu0 %499
  %vm501 = vcmask 908288
  %v502 = vsel %vm501, %v492, %v494
  %v503 = vsel %vm501, %v494, %v496
  %v504 = vsel %vm501, %v496, %v498
  %v505 = vsel %vm501, %v498, %v500
  %515 = vrot.lane.b32.xlu0 %v286, 110
  %v516 = vpop.permute.xlu0 %515
  %517 = vrot.lane.b32.xlu0 %v287, 110
  %v518 = vpop.permute.xlu0 %517
  %519 = vrot.lane.b32.xlu0 %v288, 110
  %v520 = vpop.permute.xlu0 %519
  %521 = vrot.lane.b32.xlu0 %v289, 110
  %v522 = vpop.permute.xlu0 %521
  %523 = vrot.lane.b32.xlu0 %v290, 110
  %v524 = vpop.permute.xlu0 %523
  %vm525 = vcmask 900096
  %v526 = vsel %vm525, %v516, %v518
  %v527 = vsel %vm525, %v518, %v520
  %v528 = vsel %vm525, %v520, %v522
  %v529 = vsel %vm525, %v522, %v524
  %539 = vrot.lane.b32.xlu0 %v327, 96
  %v540 = vpop.permute.xlu0 %539
  %541 = vrot.lane.b32.xlu0 %v328, 96
  %v542 = vpop.permute.xlu0 %541
  %543 = vrot.lane.b32.xlu0 %v329, 96
  %v544 = vpop.permute.xlu0 %543
  %545 = vrot.lane.b32.xlu0 %v330, 96
  %v546 = vpop.permute.xlu0 %545
  %547 = vrot.lane.b32.xlu0 %v331, 96
  %v548 = vpop.permute.xlu0 %547
  %vm549 = vcmask 785408
  %v550 = vsel %vm549, %v540, %v542
  %v551 = vsel %vm549, %v542, %v544
  %v552 = vsel %vm549, %v544, %v546
  %v553 = vsel %vm549, %v546, %v548
  %563 = vrot.lane.b32.xlu0 %v368, 95
  %v564 = vpop.permute.xlu0 %563
  %565 = vrot.lane.b32.xlu0 %v369, 95
  %v566 = vpop.permute.xlu0 %565
  %567 = vrot.lane.b32.xlu0 %v370, 95
  %v568 = vpop.permute.xlu0 %567
  %569 = vrot.lane.b32.xlu0 %v371, 95
  %v570 = vpop.permute.xlu0 %569
  %571 = vrot.lane.b32.xlu0 %v372, 95
  %v572 = vpop.permute.xlu0 %571
  %vm573 = vcmask 777216
  %v574 = vsel %vm573, %v564, %v566
  %v575 = vsel %vm573, %v566, %v568
  %v576 = vsel %vm573, %v568, %v570
  %v577 = vsel %vm573, %v570, %v572
  %587 = vrot.lane.b32.xlu0 %v409, 94
  %v588 = vpop.permute.xlu0 %587
  %589 = vrot.lane.b32.xlu0 %v410, 94
  %v590 = vpop.permute.xlu0 %589
  %591 = vrot.lane.b32.xlu0 %v411, 94
  %v592 = vpop.permute.xlu0 %591
  %593 = vrot.lane.b32.xlu0 %v412, 94
  %v594 = vpop.permute.xlu0 %593
  %595 = vrot.lane.b32.xlu0 %v413, 94
  %v596 = vpop.permute.xlu0 %595
  %vm597 = vcmask 769024
  %v598 = vsel %vm597, %v588, %v590
  %v599 = vsel %vm597, %v590, %v592
  %v600 = vsel %vm597, %v592, %v594
  %v601 = vsel %vm597, %v594, %v596
  %v606 = vpack.c.bf16 %v430, %v83
  %v607 = vpack.c.bf16 %v431, %v84
  %v608 = vpack.c.bf16 %v432, %v85
  %v609 = vpack.c.bf16 %v433, %v86
  %v610 = vpack.c.bf16 %v478, %v454
  %v611 = vpack.c.bf16 %v479, %v455
  %v612 = vpack.c.bf16 %v480, %v456
  %v613 = vpack.c.bf16 %v481, %v457
  %v614 = vpack.c.bf16 %v526, %v502
  %v615 = vpack.c.bf16 %v527, %v503
  %v616 = vpack.c.bf16 %v528, %v504
  %v617 = vpack.c.bf16 %v529, %v505
  %v618 = vpack.c.bf16 %v574, %v550
  %v619 = vpack.c.bf16 %v575, %v551
  %v620 = vpack.c.bf16 %v576, %v552
  %v621 = vpack.c.bf16 %v577, %v553
  %v622 = vpack.c.bf16 %v598, %v598
  %v623 = vpack.c.bf16 %v599, %v599
  %v624 = vpack.c.bf16 %v600, %v600
  %v625 = vpack.c.bf16 %v601, %v601
  %v626 = vld [vmem:[%s2] sm:$0xff]
  %628 = vset.pattern.permute.xlu0 0
  %629 = vperm.xlu0 %628, %v626
  %v630 = vpop.permute.xlu0 %629
  %vm632 = vcmask 588800
  %v634 = vsel %vm632, %v37, 0
  %vm636 = vcmask 1043456
  %v638 = vsel %vm636, %v622, 0
  %v641 = vsel %vm636, %v623, 0
  %v644 = vsel %vm636, %v624, 0
  %v647 = vsel %vm636, %v625, 0
  %649 = vmatprep.subr.bf16.mxu0 0
  %650 = vmatpush1.bf16.msra.mxu0 0
  %651 = vmatprep.subr.bf16.mxu0 0
  %652 = vmatpush1.bf16.msra.mxu0 0
  %653 = vmatprep.subr.bf16.mxu0 0
  %654 = vmatpush1.bf16.msra.mxu0 0
  %655 = vmatprep.subr.bf16.mxu0 %v641
  %656 = vmatpush1.bf16.msra.mxu0 %v638
  %657 = vmatprep.subr.bf16.mxu0 %v619
  %658 = vmatpush1.bf16.msra.mxu0 %v618
  %659 = vmatprep.subr.bf16.mxu0 %v615
  %660 = vmatpush1.bf16.msra.mxu0 %v614
  %661 = vmatprep.subr.bf16.mxu0 %v611
  %662 = vmatpush1.bf16.msra.mxu0 %v610
  %663 = vmatprep.subr.bf16.mxu0 %v607
  %664 = vmatpush1.bf16.msra.mxu0 %v606
  %665 = vmatprep.subr.bf16.mxu0 0
  %666 = vmatpush2.bf16.msra.mxu0 0
  %667 = vmatprep.subr.bf16.mxu0 0
  %668 = vmatpush2.bf16.msra.mxu0 0
  %669 = vmatprep.subr.bf16.mxu0 0
  %670 = vmatpush2.bf16.msra.mxu0 0
  %671 = vmatprep.subr.bf16.mxu0 0
  %672 = vmatpush2.bf16.msra.mxu0 0
  %673 = vmatprep.subr.bf16.mxu0 0
  %674 = vmatpush2.bf16.msra.mxu0 0
  %675 = vmatprep.subr.bf16.mxu0 0
  %676 = vmatpush2.bf16.msra.mxu0 0
  %677 = vmatprep.subr.bf16.mxu0 0
  %678 = vmatpush2.bf16.msra.mxu0 0
  %679 = vmatprep.subr.bf16.mxu0 0
  %680 = vmatpush2.bf16.msra.mxu0 0
  %681 = vmatprep.mubr.bf16.mxu0 0
  %682 = vmatmul.mubr.bf16.gmra.mxu0 %v634
  %v683 = vpop.f32.mrf.mxu0
  %v684 = vadd.f32 %v630, %v683
  %v685 = vpop.f32.mrf.mxu0
  %v686 = vadd.f32 %v630, %v685
  %v687 = vpop.f32.mrf.mxu0
  %v688 = vpop.f32.mrf.mxu0
  %689 = vdwg.mxu0
  %690 = vmatprep.subr.bf16.mxu0 0
  %691 = vmatpush1.bf16.msra.mxu0 0
  %692 = vmatprep.subr.bf16.mxu0 0
  %693 = vmatpush1.bf16.msra.mxu0 0
  %694 = vmatprep.subr.bf16.mxu0 0
  %695 = vmatpush1.bf16.msra.mxu0 0
  %696 = vmatprep.subr.bf16.mxu0 %v647
  %697 = vmatpush1.bf16.msra.mxu0 %v644
  %698 = vmatprep.subr.bf16.mxu0 %v621
  %699 = vmatpush1.bf16.msra.mxu0 %v620
  %700 = vmatprep.subr.bf16.mxu0 %v617
  %701 = vmatpush1.bf16.msra.mxu0 %v616
  %702 = vmatprep.subr.bf16.mxu0 %v613
  %703 = vmatpush1.bf16.msra.mxu0 %v612
  %704 = vmatprep.subr.bf16.mxu0 %v609
  %705 = vmatpush1.bf16.msra.mxu0 %v608
  %706 = vmatprep.subr.bf16.mxu0 0
  %707 = vmatpush2.bf16.msra.mxu0 0
  %708 = vmatprep.subr.bf16.mxu0 0
  %709 = vmatpush2.bf16.msra.mxu0 0
  %710 = vmatprep.subr.bf16.mxu0 0
  %711 = vmatpush2.bf16.msra.mxu0 0
  %712 = vmatprep.subr.bf16.mxu0 0
  %713 = vmatpush2.bf16.msra.mxu0 0
  %714 = vmatprep.subr.bf16.mxu0 0
  %715 = vmatpush2.bf16.msra.mxu0 0
  %716 = vmatprep.subr.bf16.mxu0 0
  %717 = vmatpush2.bf16.msra.mxu0 0
  %718 = vmatprep.subr.bf16.mxu0 0
  %719 = vmatpush2.bf16.msra.mxu0 0
  %720 = vmatprep.subr.bf16.mxu0 0
  %721 = vmatpush2.bf16.msra.mxu0 0
  %722 = vmatprep.mubr.bf16.mxu0 0
  %723 = vmatmul.mubr.bf16.gmra.mxu0 %v634
  %v724 = vpop.f32.mrf.mxu0
  %v725 = vadd.f32 %v630, %v724
  %v726 = vpop.f32.mrf.mxu0
  %v727 = vadd.f32 %v630, %v726
  %v728 = vpop.f32.mrf.mxu0
  %v729 = vpop.f32.mrf.mxu0
  %730 = vdwg.mxu0
  %v731 = vadd.f32 %v684, %v686
  %v732 = vadd.f32 %v731, %v725
  %v733 = vadd.f32 %v732, %v727
  %734 = vadd.xlane.f32.xlu0 %v733
  %v735 = vpop.xlane.xlu0 %734
  %v736 = vmul.f32 %v684, %v684
  %v737 = vmul.f32 %v686, %v686
  %v738 = vmul.f32 %v725, %v725
  %v739 = vmul.f32 %v727, %v727
  %v740 = vadd.f32 %v736, %v737
  %v741 = vadd.f32 %v740, %v738
  %v742 = vadd.f32 %v741, %v739
  %743 = vadd.xlane.f32.xlu0 %v742
  %v744 = vpop.xlane.xlu0 %743
  %v745 = vmul.f32 %v735, 0.001953125
  %v746 = vmul.f32 %v744, 0.001953125
  %v747 = vmul.f32 %v745, %v745
  %v748 = vsub.f32 %v746, %v747
  %v749 = vmax.f32 %v748, 0.0
  %v750 = vadd.f32 %v749, 1e-05
  %v751 = vrsqrt.pop %v750
  %v752 = vld [vmem:[%s5] sm:$0xff]
  %v753 = vmul.f32 %v751, %v752
  %v754 = vsub.f32 %v684, %v745
  %v755 = vsub.f32 %v686, %v745
  %v756 = vsub.f32 %v725, %v745
  %v757 = vsub.f32 %v727, %v745
  %759 = vset.pattern.permute.xlu0 0
  %760 = vperm.xlu0 %759, %v753
  %v761 = vpop.permute.xlu0 %760
  %v763 = vmul.f32 %v754, %v761
  %v764 = vmul.f32 %v755, %v761
  %v765 = vmul.f32 %v756, %v761
  %v766 = vmul.f32 %v757, %v761
  %v767 = vld [vmem:[%s6] sm:$0xff]
  %769 = vset.pattern.permute.xlu0 0
  %770 = vperm.xlu0 %769, %v767
  %v771 = vpop.permute.xlu0 %770
  %v773 = vadd.f32 %v763, %v771
  %v774 = vadd.f32 %v764, %v771
  %v775 = vadd.f32 %v765, %v771
  %v776 = vadd.f32 %v766, %v771
  %vm777 = vcmp.ge.f32.partialorder %v773, 0.0
  %vm778 = vcmp.ge.f32.partialorder %v774, 0.0
  %vm779 = vcmp.ge.f32.partialorder %v775, 0.0
  %vm780 = vcmp.ge.f32.partialorder %v776, 0.0
  %v781 = vmul.f32 %v773, 0.01
  %v782 = vmul.f32 %v774, 0.01
  %v783 = vmul.f32 %v775, 0.01
  %v784 = vmul.f32 %v776, 0.01
  %v785 = vsel %vm777, %v773, %v781
  %v786 = vsel %vm778, %v774, %v782
  %v787 = vsel %vm779, %v775, %v783
  %v788 = vsel %vm780, %v776, %v784
  %v789 = vld [vmem:[%s3] sm:$0xf]
  %794 = vrot.lane.b32.xlu0 %v785, 17
  %v795 = vpop.permute.xlu0 %794
  %796 = vrot.lane.b32.xlu0 %v786, 17
  %v797 = vpop.permute.xlu0 %796
  %798 = vrot.lane.b32.xlu0 %v787, 17
  %v799 = vpop.permute.xlu0 %798
  %800 = vrot.lane.b32.xlu0 %v788, 17
  %v801 = vpop.permute.xlu0 %800
  %v802 = vsel %vm50, %v795, %v797
  %v803 = vsel %vm50, %v797, %v799
  %v804 = vsel %vm50, %v799, %v801
  %v810 = vsel %vm50, 0.0, %v795
  %v811 = vsel %vm50, %v801, 0.0
  %v812 = vmul.f32 %v810, %v66
  %v813 = vmul.f32 %v802, %v70
  %v814 = vmul.f32 %v803, %v74
  %v815 = vmul.f32 %v804, %v78
  %v816 = vmul.f32 %v810, %v107
  %v817 = vmul.f32 %v802, %v115
  %v818 = vmul.f32 %v803, %v116
  %v819 = vmul.f32 %v804, %v117
  %v820 = vmul.f32 %v811, %v113
  %v821 = vmul.f32 %v810, %v148
  %v822 = vmul.f32 %v802, %v156
  %v823 = vmul.f32 %v803, %v157
  %v824 = vmul.f32 %v804, %v158
  %v825 = vmul.f32 %v811, %v154
  %v826 = vmul.f32 %v810, %v189
  %v827 = vmul.f32 %v802, %v197
  %v828 = vmul.f32 %v803, %v198
  %v829 = vmul.f32 %v804, %v199
  %v830 = vmul.f32 %v811, %v195
  %v831 = vmul.f32 %v810, %v230
  %v832 = vmul.f32 %v802, %v237
  %v833 = vmul.f32 %v803, %v238
  %v834 = vmul.f32 %v804, %v239
  %v835 = vmul.f32 %v811, %v236
  %v836 = vmul.f32 %v810, %v270
  %v837 = vmul.f32 %v802, %v278
  %v838 = vmul.f32 %v803, %v279
  %v839 = vmul.f32 %v804, %v280
  %v840 = vmul.f32 %v811, %v276
  %v841 = vmul.f32 %v810, %v311
  %v842 = vmul.f32 %v802, %v319
  %v843 = vmul.f32 %v803, %v320
  %v844 = vmul.f32 %v804, %v321
  %v845 = vmul.f32 %v811, %v317
  %v846 = vmul.f32 %v810, %v352
  %v847 = vmul.f32 %v802, %v360
  %v848 = vmul.f32 %v803, %v361
  %v849 = vmul.f32 %v804, %v362
  %v850 = vmul.f32 %v811, %v358
  %v851 = vmul.f32 %v810, %v393
  %v852 = vmul.f32 %v802, %v401
  %v853 = vmul.f32 %v803, %v402
  %v854 = vmul.f32 %v804, %v403
  %v855 = vmul.f32 %v811, %v399
  %861 = vrot.lane.b32.xlu0 %v816, 127
  %v862 = vpop.permute.xlu0 %861
  %863 = vrot.lane.b32.xlu0 %v817, 127
  %v864 = vpop.permute.xlu0 %863
  %865 = vrot.lane.b32.xlu0 %v818, 127
  %v866 = vpop.permute.xlu0 %865
  %867 = vrot.lane.b32.xlu0 %v819, 127
  %v868 = vpop.permute.xlu0 %867
  %869 = vrot.lane.b32.xlu0 %v820, 127
  %v870 = vpop.permute.xlu0 %869
  %v871 = vsel %vm429, %v862, %v864
  %v872 = vsel %vm429, %v864, %v866
  %v873 = vsel %vm429, %v866, %v868
  %v874 = vsel %vm429, %v868, %v870
  %884 = vrot.lane.b32.xlu0 %v821, 126
  %v885 = vpop.permute.xlu0 %884
  %886 = vrot.lane.b32.xlu0 %v822, 126
  %v887 = vpop.permute.xlu0 %886
  %888 = vrot.lane.b32.xlu0 %v823, 126
  %v889 = vpop.permute.xlu0 %888
  %890 = vrot.lane.b32.xlu0 %v824, 126
  %v891 = vpop.permute.xlu0 %890
  %892 = vrot.lane.b32.xlu0 %v825, 126
  %v893 = vpop.permute.xlu0 %892
  %v894 = vsel %vm453, %v885, %v887
  %v895 = vsel %vm453, %v887, %v889
  %v896 = vsel %vm453, %v889, %v891
  %v897 = vsel %vm453, %v891, %v893
  %907 = vrot.lane.b32.xlu0 %v826, 112
  %v908 = vpop.permute.xlu0 %907
  %909 = vrot.lane.b32.xlu0 %v827, 112
  %v910 = vpop.permute.xlu0 %909
  %911 = vrot.lane.b32.xlu0 %v828, 112
  %v912 = vpop.permute.xlu0 %911
  %913 = vrot.lane.b32.xlu0 %v829, 112
  %v914 = vpop.permute.xlu0 %913
  %915 = vrot.lane.b32.xlu0 %v830, 112
  %v916 = vpop.permute.xlu0 %915
  %v917 = vsel %vm477, %v908, %v910
  %v918 = vsel %vm477, %v910, %v912
  %v919 = vsel %vm477, %v912, %v914
  %v920 = vsel %vm477, %v914, %v916
  %930 = vrot.lane.b32.xlu0 %v831, 111
  %v931 = vpop.permute.xlu0 %930
  %932 = vrot.lane.b32.xlu0 %v832, 111
  %v933 = vpop.permute.xlu0 %932
  %934 = vrot.lane.b32.xlu0 %v833, 111
  %v935 = vpop.permute.xlu0 %934
  %936 = vrot.lane.b32.xlu0 %v834, 111
  %v937 = vpop.permute.xlu0 %936
  %938 = vrot.lane.b32.xlu0 %v835, 111
  %v939 = vpop.permute.xlu0 %938
  %v940 = vsel %vm501, %v931, %v933
  %v941 = vsel %vm501, %v933, %v935
  %v942 = vsel %vm501, %v935, %v937
  %v943 = vsel %vm501, %v937, %v939
  %953 = vrot.lane.b32.xlu0 %v836, 110
  %v954 = vpop.permute.xlu0 %953
  %955 = vrot.lane.b32.xlu0 %v837, 110
  %v956 = vpop.permute.xlu0 %955
  %957 = vrot.lane.b32.xlu0 %v838, 110
  %v958 = vpop.permute.xlu0 %957
  %959 = vrot.lane.b32.xlu0 %v839, 110
  %v960 = vpop.permute.xlu0 %959
  %961 = vrot.lane.b32.xlu0 %v840, 110
  %v962 = vpop.permute.xlu0 %961
  %v963 = vsel %vm525, %v954, %v956
  %v964 = vsel %vm525, %v956, %v958
  %v965 = vsel %vm525, %v958, %v960
  %v966 = vsel %vm525, %v960, %v962
  %976 = vrot.lane.b32.xlu0 %v841, 96
  %v977 = vpop.permute.xlu0 %976
  %978 = vrot.lane.b32.xlu0 %v842, 96
  %v979 = vpop.permute.xlu0 %978
  %980 = vrot.lane.b32.xlu0 %v843, 96
  %v981 = vpop.permute.xlu0 %980
  %982 = vrot.lane.b32.xlu0 %v844, 96
  %v983 = vpop.permute.xlu0 %982
  %984 = vrot.lane.b32.xlu0 %v845, 96
  %v985 = vpop.permute.xlu0 %984
  %v986 = vsel %vm549, %v977, %v979
  %v987 = vsel %vm549, %v979, %v981
  %v988 = vsel %vm549, %v981, %v983
  %v989 = vsel %vm549, %v983, %v985
  %999 = vrot.lane.b32.xlu0 %v846, 95
  %v1000 = vpop.permute.xlu0 %999
  %1001 = vrot.lane.b32.xlu0 %v847, 95
  %v1002 = vpop.permute.xlu0 %1001
  %1003 = vrot.lane.b32.xlu0 %v848, 95
  %v1004 = vpop.permute.xlu0 %1003
  %1005 = vrot.lane.b32.xlu0 %v849, 95
  %v1006 = vpop.permute.xlu0 %1005
  %1007 = vrot.lane.b32.xlu0 %v850, 95
  %v1008 = vpop.permute.xlu0 %1007
  %v1009 = vsel %vm573, %v1000, %v1002
  %v1010 = vsel %vm573, %v1002, %v1004
  %v1011 = vsel %vm573, %v1004, %v1006
  %v1012 = vsel %vm573, %v1006, %v1008
  %1022 = vrot.lane.b32.xlu0 %v851, 94
  %v1023 = vpop.permute.xlu0 %1022
  %1024 = vrot.lane.b32.xlu0 %v852, 94
  %v1025 = vpop.permute.xlu0 %1024
  %1026 = vrot.lane.b32.xlu0 %v853, 94
  %v1027 = vpop.permute.xlu0 %1026
  %1028 = vrot.lane.b32.xlu0 %v854, 94
  %v1029 = vpop.permute.xlu0 %1028
  %1030 = vrot.lane.b32.xlu0 %v855, 94
  %v1031 = vpop.permute.xlu0 %1030
  %v1032 = vsel %vm597, %v1023, %v1025
  %v1033 = vsel %vm597, %v1025, %v1027
  %v1034 = vsel %vm597, %v1027, %v1029
  %v1035 = vsel %vm597, %v1029, %v1031
  %v1040 = vpack.c.bf16 %v871, %v812
  %v1041 = vpack.c.bf16 %v872, %v813
  %v1042 = vpack.c.bf16 %v873, %v814
  %v1043 = vpack.c.bf16 %v874, %v815
  %v1044 = vpack.c.bf16 %v917, %v894
  %v1045 = vpack.c.bf16 %v918, %v895
  %v1046 = vpack.c.bf16 %v919, %v896
  %v1047 = vpack.c.bf16 %v920, %v897
  %v1048 = vpack.c.bf16 %v963, %v940
  %v1049 = vpack.c.bf16 %v964, %v941
  %v1050 = vpack.c.bf16 %v965, %v942
  %v1051 = vpack.c.bf16 %v966, %v943
  %v1052 = vpack.c.bf16 %v1009, %v986
  %v1053 = vpack.c.bf16 %v1010, %v987
  %v1054 = vpack.c.bf16 %v1011, %v988
  %v1055 = vpack.c.bf16 %v1012, %v989
  %v1056 = vpack.c.bf16 %v1032, %v1032
  %v1057 = vpack.c.bf16 %v1033, %v1033
  %v1058 = vpack.c.bf16 %v1034, %v1034
  %v1059 = vpack.c.bf16 %v1035, %v1035
  %v1060 = vld [vmem:[%s4] sm:$0xff]
  %1062 = vset.pattern.permute.xlu0 0
  %1063 = vperm.xlu0 %1062, %v1060
  %v1064 = vpop.permute.xlu0 %1063
  %v1067 = vsel %vm632, %v789, 0
  %v1070 = vsel %vm636, %v1056, 0
  %v1073 = vsel %vm636, %v1057, 0
  %v1076 = vsel %vm636, %v1058, 0
  %v1079 = vsel %vm636, %v1059, 0
  %1081 = vmatprep.subr.bf16.mxu0 0
  %1082 = vmatpush1.bf16.msra.mxu0 0
  %1083 = vmatprep.subr.bf16.mxu0 0
  %1084 = vmatpush1.bf16.msra.mxu0 0
  %1085 = vmatprep.subr.bf16.mxu0 0
  %1086 = vmatpush1.bf16.msra.mxu0 0
  %1087 = vmatprep.subr.bf16.mxu0 %v1073
  %1088 = vmatpush1.bf16.msra.mxu0 %v1070
  %1089 = vmatprep.subr.bf16.mxu0 %v1053
  %1090 = vmatpush1.bf16.msra.mxu0 %v1052
  %1091 = vmatprep.subr.bf16.mxu0 %v1049
  %1092 = vmatpush1.bf16.msra.mxu0 %v1048
  %1093 = vmatprep.subr.bf16.mxu0 %v1045
  %1094 = vmatpush1.bf16.msra.mxu0 %v1044
  %1095 = vmatprep.subr.bf16.mxu0 %v1041
  %1096 = vmatpush1.bf16.msra.mxu0 %v1040
  %1097 = vmatprep.subr.bf16.mxu0 0
  %1098 = vmatpush2.bf16.msra.mxu0 0
  %1099 = vmatprep.subr.bf16.mxu0 0
  %1100 = vmatpush2.bf16.msra.mxu0 0
  %1101 = vmatprep.subr.bf16.mxu0 0
  %1102 = vmatpush2.bf16.msra.mxu0 0
  %1103 = vmatprep.subr.bf16.mxu0 0
  %1104 = vmatpush2.bf16.msra.mxu0 0
  %1105 = vmatprep.subr.bf16.mxu0 0
  %1106 = vmatpush2.bf16.msra.mxu0 0
  %1107 = vmatprep.subr.bf16.mxu0 0
  %1108 = vmatpush2.bf16.msra.mxu0 0
  %1109 = vmatprep.subr.bf16.mxu0 0
  %1110 = vmatpush2.bf16.msra.mxu0 0
  %1111 = vmatprep.subr.bf16.mxu0 0
  %1112 = vmatpush2.bf16.msra.mxu0 0
  %1113 = vmatprep.mubr.bf16.mxu0 0
  %1114 = vmatmul.mubr.bf16.gmra.mxu0 %v1067
  %v1115 = vpop.f32.mrf.mxu0
  %v1116 = vadd.f32 %v1064, %v1115
  %v1117 = vpop.f32.mrf.mxu0
  %v1118 = vadd.f32 %v1064, %v1117
  %v1119 = vpop.f32.mrf.mxu0
  %v1120 = vpop.f32.mrf.mxu0
  %1121 = vdwg.mxu0
  %1122 = vmatprep.subr.bf16.mxu0 0
  %1123 = vmatpush1.bf16.msra.mxu0 0
  %1124 = vmatprep.subr.bf16.mxu0 0
  %1125 = vmatpush1.bf16.msra.mxu0 0
  %1126 = vmatprep.subr.bf16.mxu0 0
  %1127 = vmatpush1.bf16.msra.mxu0 0
  %1128 = vmatprep.subr.bf16.mxu0 %v1079
  %1129 = vmatpush1.bf16.msra.mxu0 %v1076
  %1130 = vmatprep.subr.bf16.mxu0 %v1055
  %1131 = vmatpush1.bf16.msra.mxu0 %v1054
  %1132 = vmatprep.subr.bf16.mxu0 %v1051
  %1133 = vmatpush1.bf16.msra.mxu0 %v1050
  %1134 = vmatprep.subr.bf16.mxu0 %v1047
  %1135 = vmatpush1.bf16.msra.mxu0 %v1046
  %1136 = vmatprep.subr.bf16.mxu0 %v1043
  %1137 = vmatpush1.bf16.msra.mxu0 %v1042
  %1138 = vmatprep.subr.bf16.mxu0 0
  %1139 = vmatpush2.bf16.msra.mxu0 0
  %1140 = vmatprep.subr.bf16.mxu0 0
  %1141 = vmatpush2.bf16.msra.mxu0 0
  %1142 = vmatprep.subr.bf16.mxu0 0
  %1143 = vmatpush2.bf16.msra.mxu0 0
  %1144 = vmatprep.subr.bf16.mxu0 0
  %1145 = vmatpush2.bf16.msra.mxu0 0
  %1146 = vmatprep.subr.bf16.mxu0 0
  %1147 = vmatpush2.bf16.msra.mxu0 0
  %1148 = vmatprep.subr.bf16.mxu0 0
  %1149 = vmatpush2.bf16.msra.mxu0 0
  %1150 = vmatprep.subr.bf16.mxu0 0
  %1151 = vmatpush2.bf16.msra.mxu0 0
  %1152 = vmatprep.subr.bf16.mxu0 0
  %1153 = vmatpush2.bf16.msra.mxu0 0
  %1154 = vmatprep.mubr.bf16.mxu0 0
  %1155 = vmatmul.mubr.bf16.gmra.mxu0 %v1067
  %v1156 = vpop.f32.mrf.mxu0
  %v1157 = vadd.f32 %v1064, %v1156
  %v1158 = vpop.f32.mrf.mxu0
  %v1159 = vadd.f32 %v1064, %v1158
  %v1160 = vpop.f32.mrf.mxu0
  %v1161 = vpop.f32.mrf.mxu0
  %1162 = vdwg.mxu0
  %v1163 = vadd.f32 %v1116, %v1118
  %v1164 = vadd.f32 %v1163, %v1157
  %v1165 = vadd.f32 %v1164, %v1159
  %1166 = vadd.xlane.f32.xlu0 %v1165
  %v1167 = vpop.xlane.xlu0 %1166
  %v1168 = vmul.f32 %v1116, %v1116
  %v1169 = vmul.f32 %v1118, %v1118
  %v1170 = vmul.f32 %v1157, %v1157
  %v1171 = vmul.f32 %v1159, %v1159
  %v1172 = vadd.f32 %v1168, %v1169
  %v1173 = vadd.f32 %v1172, %v1170
  %v1174 = vadd.f32 %v1173, %v1171
  %1175 = vadd.xlane.f32.xlu0 %v1174
  %v1176 = vpop.xlane.xlu0 %1175
  %v1177 = vmul.f32 %v1167, 0.001953125
  %v1178 = vmul.f32 %v1176, 0.001953125
  %v1179 = vmul.f32 %v1177, %v1177
  %v1180 = vsub.f32 %v1178, %v1179
  %v1181 = vmax.f32 %v1180, 0.0
  %v1182 = vadd.f32 %v1181, 1e-05
  %v1183 = vrsqrt.pop %v1182
  %v1184 = vmul.f32 %v1183, %v752
  %v1185 = vsub.f32 %v1116, %v1177
  %v1186 = vsub.f32 %v1118, %v1177
  %v1187 = vsub.f32 %v1157, %v1177
  %v1188 = vsub.f32 %v1159, %v1177
  %1190 = vset.pattern.permute.xlu0 0
  %1191 = vperm.xlu0 %1190, %v1184
  %v1192 = vpop.permute.xlu0 %1191
  %v1194 = vmul.f32 %v1185, %v1192
  %v1195 = vmul.f32 %v1186, %v1192
  %v1196 = vmul.f32 %v1187, %v1192
  %v1197 = vmul.f32 %v1188, %v1192
  %v1198 = vadd.f32 %v1194, %v771
  %v1199 = vadd.f32 %v1195, %v771
  %v1200 = vadd.f32 %v1196, %v771
  %v1201 = vadd.f32 %v1197, %v771
  %vm1202 = vcmp.ge.f32.partialorder %v1198, 0.0
  %vm1203 = vcmp.ge.f32.partialorder %v1199, 0.0
  %vm1204 = vcmp.ge.f32.partialorder %v1200, 0.0
  %vm1205 = vcmp.ge.f32.partialorder %v1201, 0.0
  %v1206 = vmul.f32 %v1198, 0.01
  %v1207 = vmul.f32 %v1199, 0.01
  %v1208 = vmul.f32 %v1200, 0.01
  %v1209 = vmul.f32 %v1201, 0.01
  %v1210 = vsel %vm1202, %v1198, %v1206
  %v1211 = vsel %vm1203, %v1199, %v1207
  %v1212 = vsel %vm1204, %v1200, %v1208
  %v1213 = vsel %vm1205, %v1201, %v1209
  %v1214 = vld [vmem:[%s8] sm:$0xff]
  %v1215 = vld [vmem:[%s8 + $0x8] sm:$0xff]
  %v1216 = vld [vmem:[%s8 + $0x10] sm:$0xff]
  %v1217 = vld [vmem:[%s8 + $0x18] sm:$0xff]
  %v1218 = vmul.f32 %v1210, %v1214
  %v1219 = vmul.f32 %v1211, %v1215
  %v1220 = vmul.f32 %v1212, %v1216
  %v1221 = vmul.f32 %v1213, %v1217
  %1222 = vst [vmem:[%s9] sm:$0xff] %v1218
  %1223 = vst [vmem:[%s9 + $0x8] sm:$0xff] %v1219
  %1224 = vst [vmem:[%s9 + $0x10] sm:$0xff] %v1220
  %1225 = vst [vmem:[%s9 + $0x18] sm:$0xff] %v1221
  // Predicated region
  $region38: #{conv_block_forward.1} parent=0 // pred_check
    _
  $region39: #{conv_block_forward.1} parent=0 // pred_check_branch
    %1227 = sbr.rel (0) target = $region41
  $region40: #{conv_block_forward.1} parent=0 // pred_region
    _
  $region41: #{conv_block_forward.1} parent=0 // pred_fallthru
    _
  // Predicated region
  $region42: #{conv_block_forward.1} parent=0 // pred_check
    _
  $region43: #{conv_block_forward.1} parent=0 // pred_check_branch
    %1229 = sbr.rel (0) target = $region45
  $region44: #{conv_block_forward.1} parent=0 // pred_region
    _
  $region45: #{conv_block_forward.1} parent=0 // pred_fallthru
    _

</llo_original>
